<compile_context>
chip_gen: v7x
topology: tpu7x:2x2x1
jax: 0.10.0
libtpu: 0.0.40
codegen_flags: <defaults>
</compile_context>

<pallas_src>
import functools

import jax
import jax.numpy as jnp
from jax.experimental import pallas as pl
from jax.experimental.pallas import tpu as pltpu


def _snn_kernel(x_ref, w1_ref, b1_ref, w2_ref, b2_ref,
                spk_ref, mem_ref,
                mem1_sc, mem2_sc, spk1_sc,
                *, t_chunk, b_tile, beta, threshold):
    """One (batch-tile, time-chunk) grid step of the 2-layer LIF forward.

    x_ref  : (t_chunk, b_tile, num_inputs) bf16
    w1_ref : (num_inputs, num_hidden) bf16       b1_ref: (1, num_hidden) f32
    w2_ref : (num_hidden, out_pad)    bf16       b2_ref: (1, out_pad)    f32
    spk_ref: (t_chunk, b_tile, out_pad) bf16 out
    mem_ref: (t_chunk, b_tile, out_pad) f32  out
    mem1_sc/mem2_sc: membrane carry across time chunks (VMEM scratch, f32)
    spk1_sc: (t_chunk*b_tile, num_hidden) bf16 chunk-local layer-1 spikes
    """
    f32 = jnp.float32

    # Reset membranes at the start of each batch tile's time sequence.
    @pl.when(pl.program_id(1) == 0)
    def _():
        mem1_sc[...] = jnp.zeros_like(mem1_sc)
        mem2_sc[...] = jnp.zeros_like(mem2_sc)

    num_inputs = x_ref.shape[-1]

    # ---- layer-1 matmul hoisted across the whole chunk (MXU, bf16 -> f32 acc) ----
    x = x_ref[...].reshape(t_chunk * b_tile, num_inputs)
    cur1 = jnp.dot(x, w1_ref[...], preferred_element_type=f32) + b1_ref[...]

    # ---- layer-1 LIF recurrence (elementwise, VPU) ----
    # t_chunk is small & static -> fully unrolled; live set is only mem1.
    # Spikes go straight into the bf16 scratch (0/1 exact), no f32 detour.
    # TODO(synk): lax.fori_loop with a small unroll factor for very large t_chunk.
    mem1 = mem1_sc[...]
    for t in range(t_chunk):
        mem1 = beta * mem1 + cur1[t * b_tile:(t + 1) * b_tile, :]
        fired = mem1 > threshold
        mem1 = jnp.where(fired, mem1 - threshold, mem1)        # subtractive reset
        spk1_sc[t * b_tile:(t + 1) * b_tile, :] = fired.astype(spk1_sc.dtype)
    mem1_sc[...] = mem1

    # ---- layer-2 matmul hoisted across the whole chunk ----
    cur2 = jnp.dot(spk1_sc[...], w2_ref[...], preferred_element_type=f32) + b2_ref[...]

    # ---- layer-2 LIF recurrence; per-step direct stores into the output refs ----
    mem2 = mem2_sc[...]
    for t in range(t_chunk):
        mem2 = beta * mem2 + cur2[t * b_tile:(t + 1) * b_tile, :]
        fired = mem2 > threshold
        mem2 = jnp.where(fired, mem2 - threshold, mem2)
        spk_ref[t, :, :] = fired.astype(spk_ref.dtype)
        mem_ref[t, :, :] = mem2
    mem2_sc[...] = mem2


def _pick_tiles(T, B):
    """Choose (t_chunk, b_tile): batch tile sublane-aligned (multiple of 8, or
    the whole batch) and >= 2 tiles when possible (v7x megacore); time chunk a
    divisor of T sized so each hoisted matmul has a reasonably large M."""
    if B % 16 == 0:
        b_tile = B // 2
    elif B % 8 == 0 and B > 8:
        b_tile = 8
    else:
        b_tile = B
    target_rows = max(1, pl.cdiv(256, b_tile))   # aim for >=256 rows per matmul
    t_chunk = 1
    for c in range(1, T + 1):
        if T % c == 0 and c <= target_rows:
            t_chunk = c
    return t_chunk, b_tile


def snn_forward(x, w1, b1, w2, b2, *, beta, threshold, t_chunk=None, b_tile=None):
    """x: [T, B, num_inputs] f32 -> (spk_rec, mem_rec), each [T, B, num_outputs] f32."""
    T, B, num_inputs = x.shape
    num_hidden = w1.shape[1]
    num_outputs = w2.shape[1]
    LANE = 128
    out_pad = ((num_outputs + LANE - 1) // LANE) * LANE   # lane-dense outputs

    auto_t, auto_b = _pick_tiles(T, B)
    if t_chunk is None:
        t_chunk = auto_t
    if b_tile is None:
        b_tile = auto_b
    assert T % t_chunk == 0 and B % b_tile == 0, "tiles must divide (T, B)"
    n_b = B // b_tile
    n_t = T // t_chunk

    # MXU operands in bf16; pad the output feature dim to a full 128-lane tile
    # (zero weight columns / zero bias -> padded units never spike since
    # threshold > 0; the wrapper slices them off).
    x_b = x.astype(jnp.bfloat16)
    w1_b = w1.astype(jnp.bfloat16)
    w2_b = jnp.zeros((num_hidden, out_pad), jnp.bfloat16)
    w2_b = w2_b.at[:, :num_outputs].set(w2.astype(jnp.bfloat16))
    b1_r = b1.reshape(1, num_hidden).astype(jnp.float32)
    b2_r = jnp.zeros((1, out_pad), jnp.float32)
    b2_r = b2_r.at[:, :num_outputs].set(b2.reshape(1, num_outputs).astype(jnp.float32))

    kernel = functools.partial(_snn_kernel, t_chunk=t_chunk, b_tile=b_tile,
                               beta=float(beta), threshold=float(threshold))

    grid_spec = pltpu.PrefetchScalarGridSpec(
        num_scalar_prefetch=0,
        grid=(n_b, n_t),   # (parallel batch tiles, sequential time chunks)
        in_specs=[
            pl.BlockSpec((t_chunk, b_tile, num_inputs), lambda b, t: (t, b, 0)),   # x
            pl.BlockSpec((num_inputs, num_hidden), lambda b, t: (0, 0)),           # W1
            pl.BlockSpec((1, num_hidden), lambda b, t: (0, 0)),                    # b1
            pl.BlockSpec((num_hidden, out_pad), lambda b, t: (0, 0)),              # W2
            pl.BlockSpec((1, out_pad), lambda b, t: (0, 0)),                       # b2
        ],
        out_specs=[
            pl.BlockSpec((t_chunk, b_tile, out_pad), lambda b, t: (t, b, 0)),  # spikes
            pl.BlockSpec((t_chunk, b_tile, out_pad), lambda b, t: (t, b, 0)),  # membranes
        ],
        scratch_shapes=[
            pltpu.VMEM((b_tile, num_hidden), jnp.float32),               # mem1 carry
            pltpu.VMEM((b_tile, out_pad), jnp.float32),                  # mem2 carry
            pltpu.VMEM((t_chunk * b_tile, num_hidden), jnp.bfloat16),    # spk1 chunk
        ],
    )

    spk_p, mem_p = pl.pallas_call(
        kernel,
        grid_spec=grid_spec,
        out_shape=(
            jax.ShapeDtypeStruct((T, B, out_pad), jnp.bfloat16),  # spikes: 0/1 exact
            jax.ShapeDtypeStruct((T, B, out_pad), jnp.float32),
        ),
        compiler_params=pltpu.CompilerParams(
            dimension_semantics=("parallel", "arbitrary"),
            vmem_limit_bytes=64 * 1024 * 1024,
        ),
    )(x_b, w1_b, b1_r, w2_b, b2_r)

    spk = spk_p[:, :, :num_outputs].astype(jnp.float32)
    mem = mem_p[:, :, :num_outputs]
    return spk, mem


def snn_forward_ref(x, w1, b1, w2, b2, *, beta, threshold):
    """Pure-JAX reference.  Uses the same bf16-quantized MXU operands as the
    kernel and pins matmul precision."""
    B = x.shape[1]
    hp = jax.lax.Precision.HIGHEST
    xq = x.astype(jnp.bfloat16).astype(jnp.float32)
    w1q = w1.astype(jnp.bfloat16).astype(jnp.float32)
    w2q = w2.astype(jnp.bfloat16).astype(jnp.float32)
    mem1 = jnp.zeros((B, w1.shape[1]), jnp.float32)
    mem2 = jnp.zeros((B, w2.shape[1]), jnp.float32)

    def step(carry, xt):
        mem1, mem2 = carry
        cur1 = jnp.dot(xt, w1q, precision=hp) + b1
        mem1 = beta * mem1 + cur1
        spk1 = (mem1 > threshold).astype(jnp.float32)
        mem1 = mem1 - spk1 * threshold
        cur2 = jnp.dot(spk1, w2q, precision=hp) + b2
        mem2 = beta * mem2 + cur2
        spk2 = (mem2 > threshold).astype(jnp.float32)
        mem2 = mem2 - spk2 * threshold
        return (mem1, mem2), (spk2, mem2)

    _, (spk_rec, mem_rec) = jax.lax.scan(step, (mem1, mem2), xq)
    return spk_rec, mem_rec


if __name__ == "__main__":
    # Small shapes consistent with the module's __init__.
    num_inputs, num_hidden, num_outputs = 16, 32, 16
    T, B = 8, 16
    threshold = 1.0        # tresholdLIF
    beta = 0.9             # LIF membrane decay

    key = jax.random.PRNGKey(0)
    kx, k1, kb1, k2, kb2 = jax.random.split(key, 5)

    # PyTorch nn.Linear-style init: U(-1/sqrt(fan_in), 1/sqrt(fan_in)).
    lim1 = 1.0 / jnp.sqrt(num_inputs)
    lim2 = 1.0 / jnp.sqrt(num_hidden)
    w1 = jax.random.uniform(k1, (num_inputs, num_hidden), jnp.float32, -lim1, lim1)
    b1 = jax.random.uniform(kb1, (1, num_hidden), jnp.float32, -lim1, lim1)
    w2 = jax.random.uniform(k2, (num_hidden, num_outputs), jnp.float32, -lim2, lim2)
    b2 = jax.random.uniform(kb2, (1, num_outputs), jnp.float32, -lim2, lim2)

    # Input currents / spike train: [T, B, num_inputs].
    x = jax.random.uniform(kx, (T, B, num_inputs), jnp.float32)

    # t_chunk=4, b_tile=8 -> grid (2, 2): exercises both the parallel batch
    # axis and the sequential time axis (membrane carry across chunks).
    spk_rec, mem_rec = snn_forward(x, w1, b1, w2, b2,
                                   beta=beta, threshold=threshold,
                                   t_chunk=4, b_tile=8)
    jax.block_until_ready((spk_rec, mem_rec))

    spk_exp, mem_exp = snn_forward_ref(x, w1, b1, w2, b2,
                                       beta=beta, threshold=threshold)

    # Threshold-margin-aware validation (spikes are discrete; bf16 MXU operands
    # may only flip spikes whose membrane grazes the threshold).
    if bool(jnp.array_equal(spk_rec, spk_exp)):
        assert bool(jnp.allclose(mem_rec, mem_exp, atol=1e-4)), "membrane mismatch"
    else:
        diff = spk_rec != spk_exp
        pre_reset = mem_exp + spk_exp * threshold
        near = jnp.abs(pre_reset - threshold) < 1e-2
        assert bool(jnp.all(jnp.where(diff, near, True))), \
            "spike mismatch away from threshold"

    print("KERNEL_OK")
</pallas_src>

<mosaic_0001>
module attributes {stable_mosaic.version = 11 : i64} {
  func.func @_snn_kernel(%arg0: i32, %arg1: i32, %arg2: memref<4x8x16xbf16, #tpu.memory_space<vmem>>, %arg3: memref<16x32xbf16, #tpu.memory_space<vmem>>, %arg4: memref<1x32xf32, #tpu.memory_space<vmem>>, %arg5: memref<32x128xbf16, #tpu.memory_space<vmem>>, %arg6: memref<1x128xf32, #tpu.memory_space<vmem>>, %arg7: memref<4x8x128xbf16, #tpu.memory_space<vmem>>, %arg8: memref<4x8x128xf32, #tpu.memory_space<vmem>>, %arg9: memref<8x32xf32, #tpu.memory_space<vmem>>, %arg10: memref<8x128xf32, #tpu.memory_space<vmem>>, %arg11: memref<32x32xbf16, #tpu.memory_space<vmem>>) attributes {dimension_semantics = [#tpu.dimension_semantics<parallel>, #tpu.dimension_semantics<arbitrary>], iteration_bounds = array<i64: 2, 2>, scalar_prefetch = 0 : i64, scratch_operands = 3 : i64, tpu.core_type = #tpu.core_type<tc>, window_params = [{transform_indices = @transform_0, window_bounds = array<i64: 4, 8, 16>}, {pipeline_mode = #tpu.pipeline_mode<synchronous>, transform_indices = @transform_1, window_bounds = array<i64: 16, 32>}, {pipeline_mode = #tpu.pipeline_mode<synchronous>, transform_indices = @transform_2, window_bounds = array<i64: 1, 32>}, {pipeline_mode = #tpu.pipeline_mode<synchronous>, transform_indices = @transform_3, window_bounds = array<i64: 32, 128>}, {pipeline_mode = #tpu.pipeline_mode<synchronous>, transform_indices = @transform_4, window_bounds = array<i64: 1, 128>}, {transform_indices = @transform_5, window_bounds = array<i64: 4, 8, 128>}, {transform_indices = @transform_6, window_bounds = array<i64: 4, 8, 128>}]} {
    %c0_i32 = arith.constant 0 : i32
    %0 = arith.cmpi eq, %arg1, %c0_i32 : i32
    %1 = arith.extui %0 : i1 to i32
    %c0_i32_0 = arith.constant 0 : i32
    %2 = arith.cmpi ne, %1, %c0_i32_0 : i32
    scf.if %2 {
      %cst_72 = arith.constant 0.000000e+00 : f32
      %144 = vector.broadcast %cst_72 : f32 to vector<8x32xf32>
      %c0_73 = arith.constant 0 : index
      %c0_74 = arith.constant 0 : index
      %145 = vector.load %arg9[%c0_73, %c0_74] : memref<8x32xf32, #tpu.memory_space<vmem>>, vector<8x32xf32>
      tpu.vector_store %arg9[%c0_73, %c0_74], %144 {strides = array<i32>} : memref<8x32xf32, #tpu.memory_space<vmem>>, vector<8x32xf32>,
      %cst_75 = arith.constant 0.000000e+00 : f32
      %146 = vector.broadcast %cst_75 : f32 to vector<8x128xf32>
      %c0_76 = arith.constant 0 : index
      %c0_77 = arith.constant 0 : index
      %147 = vector.load %arg10[%c0_76, %c0_77] : memref<8x128xf32, #tpu.memory_space<vmem>>, vector<8x128xf32>
      tpu.vector_store %arg10[%c0_76, %c0_77], %146 {strides = array<i32>} : memref<8x128xf32, #tpu.memory_space<vmem>>, vector<8x128xf32>,
    } else {
    }
    %c0 = arith.constant 0 : index
    %c0_1 = arith.constant 0 : index
    %c0_2 = arith.constant 0 : index
    %3 = vector.load %arg2[%c0, %c0_1, %c0_2] : memref<4x8x16xbf16, #tpu.memory_space<vmem>>, vector<4x8x16xbf16>
    %4 = vector.shape_cast %3 : vector<4x8x16xbf16> to vector<32x16xbf16>
    %c0_3 = arith.constant 0 : index
    %c0_4 = arith.constant 0 : index
    %5 = vector.load %arg3[%c0_3, %c0_4] : memref<16x32xbf16, #tpu.memory_space<vmem>>, vector<16x32xbf16>
    %cst = arith.constant dense<0.000000e+00> : vector<32x32xf32>
    %6 = tpu.matmul %4, %5, %cst {dimension_numbers = #tpu.dot_dimension_numbers<[1], [0], [0], [1], [0, 0, 1, 1], [], []>} : vector<32x16xbf16>, vector<16x32xbf16>, vector<32x32xf32> -> vector<32x32xf32>
    %c0_5 = arith.constant 0 : index
    %c0_6 = arith.constant 0 : index
    %7 = vector.load %arg4[%c0_5, %c0_6] : memref<1x32xf32, #tpu.memory_space<vmem>>, vector<1x32xf32>
    %8 = vector.broadcast %7 : vector<1x32xf32> to vector<32x32xf32>
    %9 = arith.addf %6, %8 : vector<32x32xf32>
    %c0_7 = arith.constant 0 : index
    %c0_8 = arith.constant 0 : index
    %10 = vector.load %arg9[%c0_7, %c0_8] : memref<8x32xf32, #tpu.memory_space<vmem>>, vector<8x32xf32>
    %cst_9 = arith.constant 0.899999976 : f32
    %11 = vector.broadcast %cst_9 : f32 to vector<8x32xf32>
    %12 = arith.mulf %11, %10 : vector<8x32xf32>
    %13 = vector.extract_strided_slice %9 {offsets = [0, 0], sizes = [8, 32], strides = [1, 1]} : vector<32x32xf32> to vector<8x32xf32>
    %14 = arith.addf %12, %13 : vector<8x32xf32>
    %cst_10 = arith.constant 1.000000e+00 : f32
    %15 = vector.broadcast %cst_10 : f32 to vector<8x32xf32>
    %16 = arith.cmpf ogt, %14, %15 : vector<8x32xf32>
    %cst_11 = arith.constant 1.000000e+00 : f32
    %17 = vector.broadcast %cst_11 : f32 to vector<8x32xf32>
    %18 = arith.subf %14, %17 : vector<8x32xf32>
    %19 = arith.select %16, %18, %14 : vector<8x32xi1>, vector<8x32xf32>
    %20 = arith.extui %16 : vector<8x32xi1> to vector<8x32xi32>
    %21 = arith.sitofp %20 : vector<8x32xi32> to vector<8x32xf32>
    %22 = arith.truncf %21 : vector<8x32xf32> to vector<8x32xbf16>
    %c0_12 = arith.constant 0 : index
    %c0_13 = arith.constant 0 : index
    %23 = vector.load %arg11[%c0_12, %c0_13] : memref<32x32xbf16, #tpu.memory_space<vmem>>, vector<8x32xbf16>
    tpu.vector_store %arg11[%c0_12, %c0_13], %22 {strides = array<i32>} : memref<32x32xbf16, #tpu.memory_space<vmem>>, vector<8x32xbf16>,
    %cst_14 = arith.constant 0.899999976 : f32
    %24 = vector.broadcast %cst_14 : f32 to vector<8x32xf32>
    %25 = arith.mulf %24, %19 : vector<8x32xf32>
    %26 = vector.extract_strided_slice %9 {offsets = [8, 0], sizes = [8, 32], strides = [1, 1]} : vector<32x32xf32> to vector<8x32xf32>
    %27 = arith.addf %25, %26 : vector<8x32xf32>
    %cst_15 = arith.constant 1.000000e+00 : f32
    %28 = vector.broadcast %cst_15 : f32 to vector<8x32xf32>
    %29 = arith.cmpf ogt, %27, %28 : vector<8x32xf32>
    %cst_16 = arith.constant 1.000000e+00 : f32
    %30 = vector.broadcast %cst_16 : f32 to vector<8x32xf32>
    %31 = arith.subf %27, %30 : vector<8x32xf32>
    %32 = arith.select %29, %31, %27 : vector<8x32xi1>, vector<8x32xf32>
    %33 = arith.extui %29 : vector<8x32xi1> to vector<8x32xi32>
    %34 = arith.sitofp %33 : vector<8x32xi32> to vector<8x32xf32>
    %35 = arith.truncf %34 : vector<8x32xf32> to vector<8x32xbf16>
    %c8 = arith.constant 8 : index
    %c0_17 = arith.constant 0 : index
    %36 = vector.load %arg11[%c8, %c0_17] : memref<32x32xbf16, #tpu.memory_space<vmem>>, vector<8x32xbf16>
    tpu.vector_store %arg11[%c8, %c0_17], %35 {strides = array<i32>} : memref<32x32xbf16, #tpu.memory_space<vmem>>, vector<8x32xbf16>,
    %cst_18 = arith.constant 0.899999976 : f32
    %37 = vector.broadcast %cst_18 : f32 to vector<8x32xf32>
    %38 = arith.mulf %37, %32 : vector<8x32xf32>
    %39 = vector.extract_strided_slice %9 {offsets = [16, 0], sizes = [8, 32], strides = [1, 1]} : vector<32x32xf32> to vector<8x32xf32>
    %40 = arith.addf %38, %39 : vector<8x32xf32>
    %cst_19 = arith.constant 1.000000e+00 : f32
    %41 = vector.broadcast %cst_19 : f32 to vector<8x32xf32>
    %42 = arith.cmpf ogt, %40, %41 : vector<8x32xf32>
    %cst_20 = arith.constant 1.000000e+00 : f32
    %43 = vector.broadcast %cst_20 : f32 to vector<8x32xf32>
    %44 = arith.subf %40, %43 : vector<8x32xf32>
    %45 = arith.select %42, %44, %40 : vector<8x32xi1>, vector<8x32xf32>
    %46 = arith.extui %42 : vector<8x32xi1> to vector<8x32xi32>
    %47 = arith.sitofp %46 : vector<8x32xi32> to vector<8x32xf32>
    %48 = arith.truncf %47 : vector<8x32xf32> to vector<8x32xbf16>
    %c16 = arith.constant 16 : index
    %c0_21 = arith.constant 0 : index
    %49 = vector.load %arg11[%c16, %c0_21] : memref<32x32xbf16, #tpu.memory_space<vmem>>, vector<8x32xbf16>
    tpu.vector_store %arg11[%c16, %c0_21], %48 {strides = array<i32>} : memref<32x32xbf16, #tpu.memory_space<vmem>>, vector<8x32xbf16>,
    %cst_22 = arith.constant 0.899999976 : f32
    %50 = vector.broadcast %cst_22 : f32 to vector<8x32xf32>
    %51 = arith.mulf %50, %45 : vector<8x32xf32>
    %52 = vector.extract_strided_slice %9 {offsets = [24, 0], sizes = [8, 32], strides = [1, 1]} : vector<32x32xf32> to vector<8x32xf32>
    %53 = arith.addf %51, %52 : vector<8x32xf32>
    %cst_23 = arith.constant 1.000000e+00 : f32
    %54 = vector.broadcast %cst_23 : f32 to vector<8x32xf32>
    %55 = arith.cmpf ogt, %53, %54 : vector<8x32xf32>
    %cst_24 = arith.constant 1.000000e+00 : f32
    %56 = vector.broadcast %cst_24 : f32 to vector<8x32xf32>
    %57 = arith.subf %53, %56 : vector<8x32xf32>
    %58 = arith.select %55, %57, %53 : vector<8x32xi1>, vector<8x32xf32>
    %59 = arith.extui %55 : vector<8x32xi1> to vector<8x32xi32>
    %60 = arith.sitofp %59 : vector<8x32xi32> to vector<8x32xf32>
    %61 = arith.truncf %60 : vector<8x32xf32> to vector<8x32xbf16>
    %c24 = arith.constant 24 : index
    %c0_25 = arith.constant 0 : index
    %62 = vector.load %arg11[%c24, %c0_25] : memref<32x32xbf16, #tpu.memory_space<vmem>>, vector<8x32xbf16>
    tpu.vector_store %arg11[%c24, %c0_25], %61 {strides = array<i32>} : memref<32x32xbf16, #tpu.memory_space<vmem>>, vector<8x32xbf16>,
    %c0_26 = arith.constant 0 : index
    %c0_27 = arith.constant 0 : index
    %63 = vector.load %arg9[%c0_26, %c0_27] : memref<8x32xf32, #tpu.memory_space<vmem>>, vector<8x32xf32>
    tpu.vector_store %arg9[%c0_26, %c0_27], %58 {strides = array<i32>} : memref<8x32xf32, #tpu.memory_space<vmem>>, vector<8x32xf32>,
    %c0_28 = arith.constant 0 : index
    %c0_29 = arith.constant 0 : index
    %64 = vector.load %arg11[%c0_28, %c0_29] : memref<32x32xbf16, #tpu.memory_space<vmem>>, vector<32x32xbf16>
    %c0_30 = arith.constant 0 : index
    %c0_31 = arith.constant 0 : index
    %65 = vector.load %arg5[%c0_30, %c0_31] : memref<32x128xbf16, #tpu.memory_space<vmem>>, vector<32x128xbf16>
    %cst_32 = arith.constant dense<0.000000e+00> : vector<32x128xf32>
    %66 = tpu.matmul %64, %65, %cst_32 {dimension_numbers = #tpu.dot_dimension_numbers<[1], [0], [0], [1], [0, 0, 1, 1], [], []>} : vector<32x32xbf16>, vector<32x128xbf16>, vector<32x128xf32> -> vector<32x128xf32>
    %c0_33 = arith.constant 0 : index
    %c0_34 = arith.constant 0 : index
    %67 = vector.load %arg6[%c0_33, %c0_34] : memref<1x128xf32, #tpu.memory_space<vmem>>, vector<1x128xf32>
    %68 = vector.broadcast %67 : vector<1x128xf32> to vector<32x128xf32>
    %69 = arith.addf %66, %68 : vector<32x128xf32>
    %c0_35 = arith.constant 0 : index
    %c0_36 = arith.constant 0 : index
    %70 = vector.load %arg10[%c0_35, %c0_36] : memref<8x128xf32, #tpu.memory_space<vmem>>, vector<8x128xf32>
    %cst_37 = arith.constant 0.899999976 : f32
    %71 = vector.broadcast %cst_37 : f32 to vector<8x128xf32>
    %72 = arith.mulf %71, %70 : vector<8x128xf32>
    %73 = vector.extract_strided_slice %69 {offsets = [0, 0], sizes = [8, 128], strides = [1, 1]} : vector<32x128xf32> to vector<8x128xf32>
    %74 = arith.addf %72, %73 : vector<8x128xf32>
    %cst_38 = arith.constant 1.000000e+00 : f32
    %75 = vector.broadcast %cst_38 : f32 to vector<8x128xf32>
    %76 = arith.cmpf ogt, %74, %75 : vector<8x128xf32>
    %cst_39 = arith.constant 1.000000e+00 : f32
    %77 = vector.broadcast %cst_39 : f32 to vector<8x128xf32>
    %78 = arith.subf %74, %77 : vector<8x128xf32>
    %79 = arith.select %76, %78, %74 : vector<8x128xi1>, vector<8x128xf32>
    %80 = arith.extui %76 : vector<8x128xi1> to vector<8x128xi32>
    %81 = arith.sitofp %80 : vector<8x128xi32> to vector<8x128xf32>
    %82 = arith.truncf %81 : vector<8x128xf32> to vector<8x128xbf16>
    %c0_40 = arith.constant 0 : index
    %c0_41 = arith.constant 0 : index
    %c0_42 = arith.constant 0 : index
    %83 = vector.load %arg7[%c0_40, %c0_41, %c0_42] : memref<4x8x128xbf16, #tpu.memory_space<vmem>>, vector<1x8x128xbf16>
    %84 = vector.shape_cast %83 : vector<1x8x128xbf16> to vector<8x128xbf16>
    %85 = vector.shape_cast %82 : vector<8x128xbf16> to vector<1x8x128xbf16>
    tpu.vector_store %arg7[%c0_40, %c0_41, %c0_42], %85 {strides = array<i32>} : memref<4x8x128xbf16, #tpu.memory_space<vmem>>, vector<1x8x128xbf16>,
    %c0_43 = arith.constant 0 : index
    %c0_44 = arith.constant 0 : index
    %c0_45 = arith.constant 0 : index
    %86 = vector.load %arg8[%c0_43, %c0_44, %c0_45] : memref<4x8x128xf32, #tpu.memory_space<vmem>>, vector<1x8x128xf32>
    %87 = vector.shape_cast %86 : vector<1x8x128xf32> to vector<8x128xf32>
    %88 = vector.shape_cast %79 : vector<8x128xf32> to vector<1x8x128xf32>
    tpu.vector_store %arg8[%c0_43, %c0_44, %c0_45], %88 {strides = array<i32>} : memref<4x8x128xf32, #tpu.memory_space<vmem>>, vector<1x8x128xf32>,
    %cst_46 = arith.constant 0.899999976 : f32
    %89 = vector.broadcast %cst_46 : f32 to vector<8x128xf32>
    %90 = arith.mulf %89, %79 : vector<8x128xf32>
    %91 = vector.extract_strided_slice %69 {offsets = [8, 0], sizes = [8, 128], strides = [1, 1]} : vector<32x128xf32> to vector<8x128xf32>
    %92 = arith.addf %90, %91 : vector<8x128xf32>
    %cst_47 = arith.constant 1.000000e+00 : f32
    %93 = vector.broadcast %cst_47 : f32 to vector<8x128xf32>
    %94 = arith.cmpf ogt, %92, %93 : vector<8x128xf32>
    %cst_48 = arith.constant 1.000000e+00 : f32
    %95 = vector.broadcast %cst_48 : f32 to vector<8x128xf32>
    %96 = arith.subf %92, %95 : vector<8x128xf32>
    %97 = arith.select %94, %96, %92 : vector<8x128xi1>, vector<8x128xf32>
    %98 = arith.extui %94 : vector<8x128xi1> to vector<8x128xi32>
    %99 = arith.sitofp %98 : vector<8x128xi32> to vector<8x128xf32>
    %100 = arith.truncf %99 : vector<8x128xf32> to vector<8x128xbf16>
    %c1 = arith.constant 1 : index
    %c0_49 = arith.constant 0 : index
    %c0_50 = arith.constant 0 : index
    %101 = vector.load %arg7[%c1, %c0_49, %c0_50] : memref<4x8x128xbf16, #tpu.memory_space<vmem>>, vector<1x8x128xbf16>
    %102 = vector.shape_cast %101 : vector<1x8x128xbf16> to vector<8x128xbf16>
    %103 = vector.shape_cast %100 : vector<8x128xbf16> to vector<1x8x128xbf16>
    tpu.vector_store %arg7[%c1, %c0_49, %c0_50], %103 {strides = array<i32>} : memref<4x8x128xbf16, #tpu.memory_space<vmem>>, vector<1x8x128xbf16>,
    %c1_51 = arith.constant 1 : index
    %c0_52 = arith.constant 0 : index
    %c0_53 = arith.constant 0 : index
    %104 = vector.load %arg8[%c1_51, %c0_52, %c0_53] : memref<4x8x128xf32, #tpu.memory_space<vmem>>, vector<1x8x128xf32>
    %105 = vector.shape_cast %104 : vector<1x8x128xf32> to vector<8x128xf32>
    %106 = vector.shape_cast %97 : vector<8x128xf32> to vector<1x8x128xf32>
    tpu.vector_store %arg8[%c1_51, %c0_52, %c0_53], %106 {strides = array<i32>} : memref<4x8x128xf32, #tpu.memory_space<vmem>>, vector<1x8x128xf32>,
    %cst_54 = arith.constant 0.899999976 : f32
    %107 = vector.broadcast %cst_54 : f32 to vector<8x128xf32>
    %108 = arith.mulf %107, %97 : vector<8x128xf32>
    %109 = vector.extract_strided_slice %69 {offsets = [16, 0], sizes = [8, 128], strides = [1, 1]} : vector<32x128xf32> to vector<8x128xf32>
    %110 = arith.addf %108, %109 : vector<8x128xf32>
    %cst_55 = arith.constant 1.000000e+00 : f32
    %111 = vector.broadcast %cst_55 : f32 to vector<8x128xf32>
    %112 = arith.cmpf ogt, %110, %111 : vector<8x128xf32>
    %cst_56 = arith.constant 1.000000e+00 : f32
    %113 = vector.broadcast %cst_56 : f32 to vector<8x128xf32>
    %114 = arith.subf %110, %113 : vector<8x128xf32>
    %115 = arith.select %112, %114, %110 : vector<8x128xi1>, vector<8x128xf32>
    %116 = arith.extui %112 : vector<8x128xi1> to vector<8x128xi32>
    %117 = arith.sitofp %116 : vector<8x128xi32> to vector<8x128xf32>
    %118 = arith.truncf %117 : vector<8x128xf32> to vector<8x128xbf16>
    %c2 = arith.constant 2 : index
    %c0_57 = arith.constant 0 : index
    %c0_58 = arith.constant 0 : index
    %119 = vector.load %arg7[%c2, %c0_57, %c0_58] : memref<4x8x128xbf16, #tpu.memory_space<vmem>>, vector<1x8x128xbf16>
    %120 = vector.shape_cast %119 : vector<1x8x128xbf16> to vector<8x128xbf16>
    %121 = vector.shape_cast %118 : vector<8x128xbf16> to vector<1x8x128xbf16>
    tpu.vector_store %arg7[%c2, %c0_57, %c0_58], %121 {strides = array<i32>} : memref<4x8x128xbf16, #tpu.memory_space<vmem>>, vector<1x8x128xbf16>,
    %c2_59 = arith.constant 2 : index
    %c0_60 = arith.constant 0 : index
    %c0_61 = arith.constant 0 : index
    %122 = vector.load %arg8[%c2_59, %c0_60, %c0_61] : memref<4x8x128xf32, #tpu.memory_space<vmem>>, vector<1x8x128xf32>
    %123 = vector.shape_cast %122 : vector<1x8x128xf32> to vector<8x128xf32>
    %124 = vector.shape_cast %115 : vector<8x128xf32> to vector<1x8x128xf32>
    tpu.vector_store %arg8[%c2_59, %c0_60, %c0_61], %124 {strides = array<i32>} : memref<4x8x128xf32, #tpu.memory_space<vmem>>, vector<1x8x128xf32>,
    %cst_62 = arith.constant 0.899999976 : f32
    %125 = vector.broadcast %cst_62 : f32 to vector<8x128xf32>
    %126 = arith.mulf %125, %115 : vector<8x128xf32>
    %127 = vector.extract_strided_slice %69 {offsets = [24, 0], sizes = [8, 128], strides = [1, 1]} : vector<32x128xf32> to vector<8x128xf32>
    %128 = arith.addf %126, %127 : vector<8x128xf32>
    %cst_63 = arith.constant 1.000000e+00 : f32
    %129 = vector.broadcast %cst_63 : f32 to vector<8x128xf32>
    %130 = arith.cmpf ogt, %128, %129 : vector<8x128xf32>
    %cst_64 = arith.constant 1.000000e+00 : f32
    %131 = vector.broadcast %cst_64 : f32 to vector<8x128xf32>
    %132 = arith.subf %128, %131 : vector<8x128xf32>
    %133 = arith.select %130, %132, %128 : vector<8x128xi1>, vector<8x128xf32>
    %134 = arith.extui %130 : vector<8x128xi1> to vector<8x128xi32>
    %135 = arith.sitofp %134 : vector<8x128xi32> to vector<8x128xf32>
    %136 = arith.truncf %135 : vector<8x128xf32> to vector<8x128xbf16>
    %c3 = arith.constant 3 : index
    %c0_65 = arith.constant 0 : index
    %c0_66 = arith.constant 0 : index
    %137 = vector.load %arg7[%c3, %c0_65, %c0_66] : memref<4x8x128xbf16, #tpu.memory_space<vmem>>, vector<1x8x128xbf16>
    %138 = vector.shape_cast %137 : vector<1x8x128xbf16> to vector<8x128xbf16>
    %139 = vector.shape_cast %136 : vector<8x128xbf16> to vector<1x8x128xbf16>
    tpu.vector_store %arg7[%c3, %c0_65, %c0_66], %139 {strides = array<i32>} : memref<4x8x128xbf16, #tpu.memory_space<vmem>>, vector<1x8x128xbf16>,
    %c3_67 = arith.constant 3 : index
    %c0_68 = arith.constant 0 : index
    %c0_69 = arith.constant 0 : index
    %140 = vector.load %arg8[%c3_67, %c0_68, %c0_69] : memref<4x8x128xf32, #tpu.memory_space<vmem>>, vector<1x8x128xf32>
    %141 = vector.shape_cast %140 : vector<1x8x128xf32> to vector<8x128xf32>
    %142 = vector.shape_cast %133 : vector<8x128xf32> to vector<1x8x128xf32>
    tpu.vector_store %arg8[%c3_67, %c0_68, %c0_69], %142 {strides = array<i32>} : memref<4x8x128xf32, #tpu.memory_space<vmem>>, vector<1x8x128xf32>,
    %c0_70 = arith.constant 0 : index
    %c0_71 = arith.constant 0 : index
    %143 = vector.load %arg10[%c0_70, %c0_71] : memref<8x128xf32, #tpu.memory_space<vmem>>, vector<8x128xf32>
    tpu.vector_store %arg10[%c0_70, %c0_71], %133 {strides = array<i32>} : memref<8x128xf32, #tpu.memory_space<vmem>>, vector<8x128xf32>,
    return
  }
  func.func @transform_0(%arg0: i32, %arg1: i32) -> (i32, i32, i32) {
    %c0_i32 = arith.constant 0 : i32
    %c0_i32_0 = arith.constant 0 : i32
    return %arg1, %arg0, %c0_i32 : i32, i32, i32
  }
  func.func @transform_1(%arg0: i32, %arg1: i32) -> (i32, i32) {
    %c0_i32 = arith.constant 0 : i32
    %c0_i32_0 = arith.constant 0 : i32
    %c0_i32_1 = arith.constant 0 : i32
    return %c0_i32, %c0_i32_0 : i32, i32
  }
  func.func @transform_2(%arg0: i32, %arg1: i32) -> (i32, i32) {
    %c0_i32 = arith.constant 0 : i32
    %c0_i32_0 = arith.constant 0 : i32
    %c0_i32_1 = arith.constant 0 : i32
    return %c0_i32, %c0_i32_0 : i32, i32
  }
  func.func @transform_3(%arg0: i32, %arg1: i32) -> (i32, i32) {
    %c0_i32 = arith.constant 0 : i32
    %c0_i32_0 = arith.constant 0 : i32
    %c0_i32_1 = arith.constant 0 : i32
    return %c0_i32, %c0_i32_0 : i32, i32
  }
  func.func @transform_4(%arg0: i32, %arg1: i32) -> (i32, i32) {
    %c0_i32 = arith.constant 0 : i32
    %c0_i32_0 = arith.constant 0 : i32
    %c0_i32_1 = arith.constant 0 : i32
    return %c0_i32, %c0_i32_0 : i32, i32
  }
  func.func @transform_5(%arg0: i32, %arg1: i32) -> (i32, i32, i32) {
    %c0_i32 = arith.constant 0 : i32
    %c0_i32_0 = arith.constant 0 : i32
    return %arg1, %arg0, %c0_i32 : i32, i32, i32
  }
  func.func @transform_6(%arg0: i32, %arg1: i32) -> (i32, i32, i32) {
    %c0_i32 = arith.constant 0 : i32
    %c0_i32_0 = arith.constant 0 : i32
    return %arg1, %arg0, %c0_i32 : i32, i32, i32
  }
}

</mosaic_0001>

<llo_original>
// kernel: tpu_custom_call.1
$region0: #{tpu_custom_call.1}
  #allocation0 [shape = 'u32[]', space=smem, size = 0x4, offset = 0x4, fixed_abs, tag = 'smem constant byte address 0x4 - core index']
  #allocation1 [shape = 'u32[144,128]{1,0:T(1,128)}', space=vmem, size = 0x12000, scoped, tag = 'internal scratch']
  #allocation2 [shape = 'f32[8,32]{1,0:T(8,128)}', space=vmem, size = 0x1000, scoped, tag = 'scratch operand']
  #allocation3 [shape = 'f32[8,128]{1,0:T(8,128)}', space=vmem, size = 0x1000, scoped, tag = 'scratch operand']
  #allocation4 [shape = 'bf16[32,32]{1,0:T(16,128)(2,1)}', space=vmem, size = 0x2000, scoped, tag = 'scratch operand']
  %s0 = inlined_call_operand.hbm [shape: bf16[8,16,16], index: 0, kind: input, shape index: {}]
  %s1 = inlined_call_operand.hbm [shape: bf16[16,32], index: 1, kind: input, shape index: {}]
  %s2 = inlined_call_operand.hbm [shape: f32[1,32], index: 2, kind: input, shape index: {}]
  %s3 = inlined_call_operand.hbm [shape: bf16[32,128], index: 3, kind: input, shape index: {}]
  %s4 = inlined_call_operand.hbm [shape: f32[1,128], index: 4, kind: input, shape index: {}]
  %s5 = inlined_call_operand.hbm [shape: bf16[8,16,128], index: 5, kind: output, shape index: {0}]
  %s6 = inlined_call_operand.hbm [shape: f32[8,16,128], index: 6, kind: output, shape index: {1}]
  %7 = xla_tuple %s5, %s6
  %s8 = sld [smem:[#allocation0]]
  $region85: #{tpu_custom_call.1} parent=0
    _
  %s10 = ssub.s32 1, %s8
  %s11 = scalar_select 0, %s10, %s8
  $region1: #{tpu_custom_call.1} parent=0
    #allocation5 [shape = 'u8[16384]{0}', space=vmem, size = 0x4000, scoped, tag = 'input window, operand 0']
    #allocation6 [shape = 's32[2]{0}', space=sflag, size = 0x8, scoped, tag = 'scoped memory for tpu_custom_call.1']
    #allocation7 [shape = 's32[2]{0}', space=sflag, size = 0x8, scoped, tag = 'scoped memory for tpu_custom_call.1']
    #allocation8 [shape = 'u8[4096]{0}', space=vmem, size = 0x1000, scoped, tag = 'input window, operand 1, single buffered']
    #allocation9 [shape = 's32[1]{0}', space=sflag, size = 0x4, scoped, tag = 'scoped memory for tpu_custom_call.1']
    #allocation10 [shape = 'u8[512]{0}', space=vmem, size = 0x400, scoped, tag = 'input window, operand 2, single buffered']
    #allocation11 [shape = 'u8[8192]{0}', space=vmem, size = 0x2000, scoped, tag = 'input window, operand 3, single buffered']
    #allocation12 [shape = 's32[1]{0}', space=sflag, size = 0x4, scoped, tag = 'scoped memory for tpu_custom_call.1']
    #allocation13 [shape = 'u8[512]{0}', space=vmem, size = 0x400, scoped, tag = 'input window, operand 4, single buffered']
    #allocation14 [shape = 'u8[16384]{0}', space=vmem, size = 0x4000, scoped, tag = 'output window, operand 0']
    #allocation15 [shape = 'u8[32768]{0}', space=vmem, size = 0x8000, scoped, tag = 'output window, operand 1']
    #allocation16 [shape = 's32[2]{0}', space=sflag, size = 0x8, scoped, tag = 'scoped memory for tpu_custom_call.1']
    %12 = vsyncpa [#allocation6], 0
    %s13 = scalar_lea.sflag [#allocation6], 1
    %14 = vsyncpa %s13, 0
    %15 = vsyncpa [#allocation9], 0
    %16 = vsyncpa [#allocation12], 0
    %17 = vsyncpa [#allocation7], 0
    %s18 = scalar_lea.sflag [#allocation7], 1
    %19 = vsyncpa %s18, 0
    %20 = vsyncpa [#allocation16], 0
    %s21 = scalar_lea.sflag [#allocation16], 1
    %22 = vsyncpa %s21, 0
    loop: start=0, step=1, limit=6
    $region2: #{tpu_custom_call.1} parent=1 // loop_pre_header
      _
    $region3: #{tpu_custom_call.1} parent=1 // loop_header
      %s24 = sphi 0, %s28
      %p25 = scmp.ge.s32.totalorder %s24, 6
      %s31 = sphi 0, %s43
      %s32 = sphi 0, %s39
      %s33 = sphi 0, %s31
      %s34 = sphi 0, %s32
      %s35 = sphi 0, %s33
      %s36 = sphi 0, %s34
      %s48 = sphi 0, %s50
      %s51 = sphi 0, %s48
      %s52 = sphi 0, %s51
      %s68 = sphi 0, %s52
      %s72 = sphi 0, %s72
      %s74 = sphi 0, %s72
      %s75 = sphi 0, %s74
      %s89 = sphi 0, %s75
      %s93 = sphi 0, %s93
      %s95 = sphi 0, %s93
      %s96 = sphi 0, %s95
      %s110 = sphi 0, %s96
      %s114 = sphi 0, %s114
      %s116 = sphi 0, %s114
      %s117 = sphi 0, %s116
      %s131 = sphi 0, %s117
      %s135 = sphi 0, %s135
      %s137 = sphi 0, %s135
      %s138 = sphi 0, %s137
      %s152 = sphi 0, %s138
      %s160 = sphi 0, %s162
      %s163 = sphi 0, %s160
      %s164 = sphi 0, %s163
      %s180 = sphi 0, %s164
      %s188 = sphi 0, %s190
      %s191 = sphi 0, %s188
      %s192 = sphi 0, %s191
      %s208 = sphi 0, %s192
    $region4: #{tpu_custom_call.1} parent=1 // loop_header_branch
      %27 = sbr.rel (%p25) target = $region8
    $region5: #{tpu_custom_call.1} parent=1 // loop_body
      %s29 = ssub.s32 %s24, 1
      %s30 = ssub.s32 %s24, 2
      %s37 = sadd.s32 1, %s32
      %p38 = scmp.ge.s32.totalorder %s37, 2
      %s39 = scalar_select %p38, 0, %s37
      %s40 = sadd.s32 1, %s31
      %s41 = scalar_select %p38, %s40, %s31
      %p42 = scmp.ge.s32.totalorder %s41, 2
      %s43 = scalar_select %p42, 0, %s41
      %s44 = ssub.s32 %s32, %s39
      %s45 = ssub.s32 %s31, %s43
      %s46 = sor.u32 %s44, %s45
      %p47 = scmp.eq.s32.totalorder %s46, 0
      %s49 = sadd.s32 %s48, 1
      %s50 = scalar_select %p47, %s48, %s49
      %p53 = pneg %p47
      %p54 = scmp.eq.s32.totalorder %s24, 3
      %p55 = por %p53, %p54
      %p56 = scmp.ne.s32.totalorder %s48, %s51
      %p57 = scmp.eq.s32.totalorder %s24, 0
      %p58 = por %p56, %p57
      %p59 = scmp.ne.s32.totalorder %s48, %s51
      %p60 = scmp.eq.s32.totalorder %s29, 3
      %p61 = por %p59, %p60
      %p62 = scmp.ne.s32.totalorder %s51, %s52
      %p63 = scmp.eq.s32.totalorder %s29, 0
      %p64 = por %p62, %p63
      %p65 = scmp.ne.s32.totalorder %s51, %s52
      %p66 = scmp.eq.s32.totalorder %s30, 3
      %p67 = por %p65, %p66
      %p69 = scmp.ne.s32.totalorder %s52, %s68
      %p70 = scmp.eq.s32.totalorder %s30, 0
      %p71 = por %p69, %p70
      %s73 = sadd.s32 %s72, 1
      %p76 = scmp.eq.s32.totalorder %s24, 3
      %p77 = scmp.ne.s32.totalorder %s72, %s74
      %p78 = scmp.eq.s32.totalorder %s24, 0
      %p79 = por %p77, %p78
      %p80 = scmp.ne.s32.totalorder %s72, %s74
      %p81 = scmp.eq.s32.totalorder %s29, 3
      %p82 = por %p80, %p81
      %p83 = scmp.ne.s32.totalorder %s74, %s75
      %p84 = scmp.eq.s32.totalorder %s29, 0
      %p85 = por %p83, %p84
      %p86 = scmp.ne.s32.totalorder %s74, %s75
      %p87 = scmp.eq.s32.totalorder %s30, 3
      %p88 = por %p86, %p87
      %p90 = scmp.ne.s32.totalorder %s75, %s89
      %p91 = scmp.eq.s32.totalorder %s30, 0
      %p92 = por %p90, %p91
      %s94 = sadd.s32 %s93, 1
      %p97 = scmp.eq.s32.totalorder %s24, 3
      %p98 = scmp.ne.s32.totalorder %s93, %s95
      %p99 = scmp.eq.s32.totalorder %s24, 0
      %p100 = por %p98, %p99
      %p101 = scmp.ne.s32.totalorder %s93, %s95
      %p102 = scmp.eq.s32.totalorder %s29, 3
      %p103 = por %p101, %p102
      %p104 = scmp.ne.s32.totalorder %s95, %s96
      %p105 = scmp.eq.s32.totalorder %s29, 0
      %p106 = por %p104, %p105
      %p107 = scmp.ne.s32.totalorder %s95, %s96
      %p108 = scmp.eq.s32.totalorder %s30, 3
      %p109 = por %p107, %p108
      %p111 = scmp.ne.s32.totalorder %s96, %s110
      %p112 = scmp.eq.s32.totalorder %s30, 0
      %p113 = por %p111, %p112
      %s115 = sadd.s32 %s114, 1
      %p118 = scmp.eq.s32.totalorder %s24, 3
      %p119 = scmp.ne.s32.totalorder %s114, %s116
      %p120 = scmp.eq.s32.totalorder %s24, 0
      %p121 = por %p119, %p120
      %p122 = scmp.ne.s32.totalorder %s114, %s116
      %p123 = scmp.eq.s32.totalorder %s29, 3
      %p124 = por %p122, %p123
      %p125 = scmp.ne.s32.totalorder %s116, %s117
      %p126 = scmp.eq.s32.totalorder %s29, 0
      %p127 = por %p125, %p126
      %p128 = scmp.ne.s32.totalorder %s116, %s117
      %p129 = scmp.eq.s32.totalorder %s30, 3
      %p130 = por %p128, %p129
      %p132 = scmp.ne.s32.totalorder %s117, %s131
      %p133 = scmp.eq.s32.totalorder %s30, 0
      %p134 = por %p132, %p133
      %s136 = sadd.s32 %s135, 1
      %p139 = scmp.eq.s32.totalorder %s24, 3
      %p140 = scmp.ne.s32.totalorder %s135, %s137
      %p141 = scmp.eq.s32.totalorder %s24, 0
      %p142 = por %p140, %p141
      %p143 = scmp.ne.s32.totalorder %s135, %s137
      %p144 = scmp.eq.s32.totalorder %s29, 3
      %p145 = por %p143, %p144
      %p146 = scmp.ne.s32.totalorder %s137, %s138
      %p147 = scmp.eq.s32.totalorder %s29, 0
      %p148 = por %p146, %p147
      %p149 = scmp.ne.s32.totalorder %s137, %s138
      %p150 = scmp.eq.s32.totalorder %s30, 3
      %p151 = por %p149, %p150
      %p153 = scmp.ne.s32.totalorder %s138, %s152
      %p154 = scmp.eq.s32.totalorder %s30, 0
      %p155 = por %p153, %p154
      %s156 = ssub.s32 %s32, %s39
      %s157 = ssub.s32 %s31, %s43
      %s158 = sor.u32 %s156, %s157
      %p159 = scmp.eq.s32.totalorder %s158, 0
      %s161 = sadd.s32 %s160, 1
      %s162 = scalar_select %p159, %s160, %s161
      %p165 = pneg %p159
      %p166 = scmp.eq.s32.totalorder %s24, 3
      %p167 = por %p165, %p166
      %p168 = scmp.ne.s32.totalorder %s160, %s163
      %p169 = scmp.eq.s32.totalorder %s24, 0
      %p170 = por %p168, %p169
      %p171 = scmp.ne.s32.totalorder %s160, %s163
      %p172 = scmp.eq.s32.totalorder %s29, 3
      %p173 = por %p171, %p172
      %p174 = scmp.ne.s32.totalorder %s163, %s164
      %p175 = scmp.eq.s32.totalorder %s29, 0
      %p176 = por %p174, %p175
      %p177 = scmp.ne.s32.totalorder %s163, %s164
      %p178 = scmp.eq.s32.totalorder %s30, 3
      %p179 = por %p177, %p178
      %p181 = scmp.ne.s32.totalorder %s164, %s180
      %p182 = scmp.eq.s32.totalorder %s30, 0
      %p183 = por %p181, %p182
      %s184 = ssub.s32 %s32, %s39
      %s185 = ssub.s32 %s31, %s43
      %s186 = sor.u32 %s184, %s185
      %p187 = scmp.eq.s32.totalorder %s186, 0
      %s189 = sadd.s32 %s188, 1
      %s190 = scalar_select %p187, %s188, %s189
      %p193 = pneg %p187
      %p194 = scmp.eq.s32.totalorder %s24, 3
      %p195 = por %p193, %p194
      %p196 = scmp.ne.s32.totalorder %s188, %s191
      %p197 = scmp.eq.s32.totalorder %s24, 0
      %p198 = por %p196, %p197
      %p199 = scmp.ne.s32.totalorder %s188, %s191
      %p200 = scmp.eq.s32.totalorder %s29, 3
      %p201 = por %p199, %p200
      %p202 = scmp.ne.s32.totalorder %s191, %s192
      %p203 = scmp.eq.s32.totalorder %s29, 0
      %p204 = por %p202, %p203
      %p205 = scmp.ne.s32.totalorder %s191, %s192
      %p206 = scmp.eq.s32.totalorder %s30, 3
      %p207 = por %p205, %p206
      %p209 = scmp.ne.s32.totalorder %s192, %s208
      %p210 = scmp.eq.s32.totalorder %s30, 0
      %p211 = por %p209, %p210
      %p212 = scmp.le.s32.totalorder 1, %s24
      %p213 = scmp.lt.s32.totalorder %s24, 5
      %p214 = pnand %p212, %p213
      %p215 = pneg %p214
      // Predicated region
      $region9: #{tpu_custom_call.1} parent=5 // pred_check
        _
      $region10: #{tpu_custom_call.1} parent=5 // pred_check_branch
        %217 = sbr.rel (%p214) target = $region12
      $region11: #{tpu_custom_call.1} parent=5 // pred_region
        %s218 = ssub.s32 %s24, 1
        // Predicated region
        $region13: #{tpu_custom_call.1} parent=11 // pred_check
          %p219 = pneg %p85
        $region14: #{tpu_custom_call.1} parent=11 // pred_check_branch
          %221 = sbr.rel (%p219) target = $region16
        $region15: #{tpu_custom_call.1} parent=11 // pred_region
          %s223 = ssub.s32 128, 128
          %224 = vsyncadd [#allocation9], %s223
          %s225 = sshll.u32 [#allocation8], 4
          %s226 = int_to_ptr.vmem [resolvable:$true] %s225
          %231 = dma.hbm_to_vmem [thread:$0]  %s1, 128, %s226, [#allocation9], 64, 64, 4
        $region16: #{tpu_custom_call.1} parent=11 // pred_fallthru
          _
        // Predicated region
        $region17: #{tpu_custom_call.1} parent=11 // pred_check
          %p232 = pneg %p106
        $region18: #{tpu_custom_call.1} parent=11 // pred_check_branch
          %234 = sbr.rel (%p232) target = $region20
        $region19: #{tpu_custom_call.1} parent=11 // pred_region
          %s236 = ssub.s32 16, 16
          %237 = vsyncadd [#allocation9], %s236
          %s239 = sshll.u32 [#allocation10], 4
          %s240 = int_to_ptr.vmem [resolvable:$true] %s239
          %242 = dma.hbm_to_vmem [thread:$0]  %s2, 16, %s240, [#allocation9]
        $region20: #{tpu_custom_call.1} parent=11 // pred_fallthru
          _
        // Predicated region
        $region21: #{tpu_custom_call.1} parent=11 // pred_check
          %p243 = pneg %p127
        $region22: #{tpu_custom_call.1} parent=11 // pred_check_branch
          %245 = sbr.rel (%p243) target = $region24
        $region23: #{tpu_custom_call.1} parent=11 // pred_region
          %s247 = ssub.s32 256, 256
          %248 = vsyncadd [#allocation12], %s247
          %s249 = sshll.u32 [#allocation11], 4
          %s250 = int_to_ptr.vmem [resolvable:$true] %s249
          %255 = dma.hbm_to_vmem [thread:$0]  %s3, 256, %s250, [#allocation12], 64, 64, 4
        $region24: #{tpu_custom_call.1} parent=11 // pred_fallthru
          _
        // Predicated region
        $region25: #{tpu_custom_call.1} parent=11 // pred_check
          %p256 = pneg %p148
        $region26: #{tpu_custom_call.1} parent=11 // pred_check_branch
          %258 = sbr.rel (%p256) target = $region28
        $region27: #{tpu_custom_call.1} parent=11 // pred_region
          %s260 = ssub.s32 16, 16
          %261 = vsyncadd [#allocation12], %s260
          %s263 = sshll.u32 [#allocation13], 4
          %s264 = int_to_ptr.vmem [resolvable:$true] %s263
          %266 = dma.hbm_to_vmem [thread:$0]  %s4, 16, %s264, [#allocation12]
        $region28: #{tpu_custom_call.1} parent=11 // pred_fallthru
          _
      $region12: #{tpu_custom_call.1} parent=5 // pred_fallthru
        _
      %p267 = scmp.lt.s32.totalorder %s24, 4
      // Predicated region
      $region29: #{tpu_custom_call.1} parent=5 // pred_check
        %p268 = pneg %p267
      $region30: #{tpu_custom_call.1} parent=5 // pred_check_branch
        %270 = sbr.rel (%p268) target = $region32
      $region31: #{tpu_custom_call.1} parent=5 // pred_region
        // Predicated region
        $region33: #{tpu_custom_call.1} parent=31 // pred_check
          %p271 = pneg %p58
        $region34: #{tpu_custom_call.1} parent=31 // pred_check_branch
          %273 = sbr.rel (%p271) target = $region36
        $region35: #{tpu_custom_call.1} parent=31 // pred_region
          %s274 = sand.u32 %s48, 1
          %s275 = scalar_lea.sflag [#allocation6], %s274
          %s276 = sand.u32 %s48, 1
          %s277 = smul.addr %s276, 16
          %s278 = scalar_lea.vmem [#allocation5], %s277
          %s279 = smul.u32 4, %s32
          %s281 = ssub.s32 256, 256
          %282 = vsyncadd %s275, %s281
          %s283 = smul.addr %s279, 2
          %s284 = sadd.s32 %s31, %s283
          %s285 = smul.addr %s284, 64
          %s286 = scalar_lea.hbm %s0, %s285
          %s287 = sshll.u32 %s278, 4
          %s288 = int_to_ptr.vmem [resolvable:$true] %s287
          %293 = dma.hbm_to_vmem [thread:$0]  %s286, 256, %s288, %s275, 128, 64, 4
        $region36: #{tpu_custom_call.1} parent=31 // pred_fallthru
          _
      $region32: #{tpu_custom_call.1} parent=5 // pred_fallthru
        _
      %p294 = scmp.le.s32.totalorder 1, %s24
      %p295 = scmp.lt.s32.totalorder %s24, 5
      %p296 = pnand %p294, %p295
      %p297 = pneg %p296
      // Predicated region
      $region37: #{tpu_custom_call.1} parent=5 // pred_check
        _
      $region38: #{tpu_custom_call.1} parent=5 // pred_check_branch
        %299 = sbr.rel (%p296) target = $region40
      $region39: #{tpu_custom_call.1} parent=5 // pred_region
        %s300 = ssub.s32 %s24, 1
        %s301 = sand.u32 %s51, 1
        %s302 = scalar_lea.sflag [#allocation6], %s301
        %s303 = sand.u32 %s51, 1
        %s304 = smul.addr %s303, 16
        %s305 = scalar_lea.vmem [#allocation5], %s304
        // Predicated region
        $region41: #{tpu_custom_call.1} parent=39 // pred_check
          %p306 = pneg %p64
        $region42: #{tpu_custom_call.1} parent=39 // pred_check_branch
          %308 = sbr.rel (%p306) target = $region44
        $region43: #{tpu_custom_call.1} parent=39 // pred_region
          %309 = dma.done %s302, 256
        $region44: #{tpu_custom_call.1} parent=39 // pred_fallthru
          _
        // Predicated region
        $region45: #{tpu_custom_call.1} parent=39 // pred_check
          %p310 = pneg %p85
        $region46: #{tpu_custom_call.1} parent=39 // pred_check_branch
          %312 = sbr.rel (%p310) target = $region48
        $region47: #{tpu_custom_call.1} parent=39 // pred_region
          %313 = dma.done [#allocation9], 128
        $region48: #{tpu_custom_call.1} parent=39 // pred_fallthru
          _
        // Predicated region
        $region49: #{tpu_custom_call.1} parent=39 // pred_check
          %p314 = pneg %p106
        $region50: #{tpu_custom_call.1} parent=39 // pred_check_branch
          %316 = sbr.rel (%p314) target = $region52
        $region51: #{tpu_custom_call.1} parent=39 // pred_region
          %317 = dma.done [#allocation9], 16
        $region52: #{tpu_custom_call.1} parent=39 // pred_fallthru
          _
        // Predicated region
        $region53: #{tpu_custom_call.1} parent=39 // pred_check
          %p318 = pneg %p127
        $region54: #{tpu_custom_call.1} parent=39 // pred_check_branch
          %320 = sbr.rel (%p318) target = $region56
        $region55: #{tpu_custom_call.1} parent=39 // pred_region
          %321 = dma.done [#allocation12], 256
        $region56: #{tpu_custom_call.1} parent=39 // pred_fallthru
          _
        // Predicated region
        $region57: #{tpu_custom_call.1} parent=39 // pred_check
          %p322 = pneg %p148
        $region58: #{tpu_custom_call.1} parent=39 // pred_check_branch
          %324 = sbr.rel (%p322) target = $region60
        $region59: #{tpu_custom_call.1} parent=39 // pred_region
          %325 = dma.done [#allocation12], 16
        $region60: #{tpu_custom_call.1} parent=39 // pred_fallthru
          _
        %s326 = sand.u32 %s51, 1
        %s327 = scalar_lea.sflag [#allocation6], %s326
        %s328 = sand.u32 %s51, 1
        %s329 = smul.addr %s328, 16
        %s330 = scalar_lea.vmem [#allocation5], %s329
        %p331 = pneg %p64
        %p332 = pneg %p61
        %p333 = pneg %p85
        %p334 = pneg %p82
        %p335 = pneg %p106
        %p336 = pneg %p103
        %p337 = pneg %p127
        %p338 = pneg %p124
        %p339 = pneg %p148
        %p340 = pneg %p145
        %p341 = pneg %p176
        %p342 = pneg %p173
        %s343 = sand.u32 %s163, 1
        %s344 = scalar_lea.sflag [#allocation7], %s343
        %s345 = sand.u32 %s163, 1
        %s346 = smul.addr %s345, 16
        %s347 = scalar_lea.vmem [#allocation14], %s346
        %p348 = pneg %p204
        %p349 = pneg %p201
        %s350 = sand.u32 %s191, 1
        %s351 = scalar_lea.sflag [#allocation16], %s350
        %s352 = sand.u32 %s191, 1
        %s353 = smul.addr %s352, 32
        %s354 = scalar_lea.vmem [#allocation15], %s353
        %s355 = smul.u32 4, %s34
        %s356 = smul.u32 4, %s34
        %s357 = smul.u32 4, %s34
        %p359 = scmp.eq.s32.totalorder %s34, 0
        // Predicated region
        $region61: #{tpu_custom_call.1} parent=39 // pred_check
          %p360 = pneg %p359
        $region62: #{tpu_custom_call.1} parent=39 // pred_check_branch
          %362 = sbr.rel (%p360) target = $region64
        $region63: #{tpu_custom_call.1} parent=39 // pred_region
          %vm363 = vcmask 261120
          %364 = vst.msk [vmem:[#allocation2] sm:$0xff] %vm363, 0.0
          %365 = vst [vmem:[#allocation3] sm:$0xff] 0.0
        $region64: #{tpu_custom_call.1} parent=39 // pred_fallthru
          _
        %v366 = vld [vmem:[%s305] sm:$0xf]
        %v367 = vld [vmem:[%s305 + $0x4] sm:$0xf]
        %v368 = vld [vmem:[%s305 + $0x8] sm:$0xf]
        %v369 = vld [vmem:[%s305 + $0xc] sm:$0xf]
        %v370 = vld [vmem:[#allocation8] sm:$0xf]
        %v371 = vld [vmem:[#allocation8 + $0x4] sm:$0xf]
        %v372 = vld [vmem:[#allocation10] sm:$0x1]
        %v374 = vlaneseq
        %v375 = vshrl.u32 %v374, 7
        %v376 = vsub.s32 0, %v375
        %v377 = vrot.slane %v372, %v376
        %v383 = vunpack.c.l.b16 %v366
        %v384 = vunpack.c.l.b16 %v367
        %v385 = vunpack.c.l.b16 %v368
        %v386 = vunpack.c.l.b16 %v369
        %v387 = vpack.c.b16 %v384, %v383
        %v388 = vpack.c.b16 %v386, %v385
        %v391 = vunpack.c.l.b16 %v370
        %v392 = vunpack.c.l.b16 %v371
        %v393 = vpack.c.b16 %v392, %v391
        %vm395 = vcmask 130048
        %v397 = vsel %vm395, %v387, 0
        %v400 = vsel %vm395, %v388, 0
        %402 = vmatprep.subr.bf16.mxu0 0
        %403 = vmatpush1.bf16.msra.mxu0 %v393
        %404 = vmatprep.subr.bf16.mxu0 0
        %405 = vmatpush1.bf16.msra.mxu0 0
        %406 = vmatprep.subr.bf16.mxu0 0
        %407 = vmatpush1.bf16.msra.mxu0 0
        %408 = vmatprep.subr.bf16.mxu0 0
        %409 = vmatpush1.bf16.msra.mxu0 0
        %410 = vmatprep.subr.bf16.mxu0 0
        %411 = vmatpush1.bf16.msra.mxu0 0
        %412 = vmatprep.subr.bf16.mxu0 0
        %413 = vmatpush1.bf16.msra.mxu0 0
        %414 = vmatprep.subr.bf16.mxu0 0
        %415 = vmatpush1.bf16.msra.mxu0 0
        %416 = vmatprep.subr.bf16.mxu0 0
        %417 = vmatpush1.bf16.msra.mxu0 0
        %418 = vmatprep.subr.bf16.mxu0 0
        %419 = vmatpush1.bf16.msra.mxu0 0
        %420 = vmatprep.subr.bf16.mxu0 0
        %421 = vmatpush1.bf16.msra.mxu0 0
        %422 = vmatprep.subr.bf16.mxu0 0
        %423 = vmatpush1.bf16.msra.mxu0 0
        %424 = vmatprep.subr.bf16.mxu0 0
        %425 = vmatpush1.bf16.msra.mxu0 0
        %426 = vmatprep.subr.bf16.mxu0 0
        %427 = vmatpush1.bf16.msra.mxu0 0
        %428 = vmatprep.subr.bf16.mxu0 0
        %429 = vmatpush1.bf16.msra.mxu0 0
        %430 = vmatprep.subr.bf16.mxu0 0
        %431 = vmatpush1.bf16.msra.mxu0 0
        %432 = vmatprep.subr.bf16.mxu0 0
        %433 = vmatpush1.bf16.msra.mxu0 0
        %434 = vmatprep.mubr.bf16.mxu0 0
        %435 = vmatmul.mubr.bf16.gmra.mrb[0].mxu0 %v397
        %v436 = vpop.f32.mrb[0].mxu0
        %v437 = vadd.f32 %v377, %v436
        %v438 = vpop.f32.mrb[0].mxu0
        %v439 = vpop.f32.mrb[0].mxu0
        %v440 = vadd.f32 %v377, %v439
        %v441 = vpop.f32.mrb[0].mxu0
        %442 = vmatprep.mubr.bf16.mxu0 0
        %443 = vmatmul.mubr.bf16.gmra.mrb[0].mxu0 %v400
        %v444 = vpop.f32.mrb[0].mxu0
        %v445 = vadd.f32 %v377, %v444
        %v446 = vpop.f32.mrb[0].mxu0
        %v447 = vpop.f32.mrb[0].mxu0
        %v448 = vadd.f32 %v377, %v447
        %v449 = vpop.f32.mrb[0].mxu0
        %450 = vdwg.mxu0
        %v451 = vld [vmem:[#allocation2] sm:$0xff]
        %v452 = vmul.f32 %v451, 0.9
        %v453 = vadd.f32 %v452, %v437
        %vm454 = vcmp.gt.f32.partialorder %v453, 1.0
        %v455 = vsub.f32 %v453, 1.0
        %v456 = vsel %vm454, %v455, %v453
        %v457 = vsel %vm454, 1, 0
        %v458 = vcvt.s32.f32 %v457
        %v459 = vpack.c.bf16 %v458, %v458
        %vm460 = vcmask 257024
        %461 = vst.msk [vmem:[#allocation4] sm:$0xf] %vm460, %v459
        %v462 = vmul.f32 %v456, 0.9
        %v463 = vadd.f32 %v462, %v440
        %vm464 = vcmp.gt.f32.partialorder %v463, 1.0
        %v465 = vsub.f32 %v463, 1.0
        %v466 = vsel %vm464, %v465, %v463
        %v467 = vsel %vm464, 1, 0
        %v468 = vcvt.s32.f32 %v467
        %v469 = vpack.c.bf16 %v468, %v468
        %v471 = vrot.slane %v469, 4
        %vm473 = vcmask 261124
        %474 = vst.msk [vmem:[#allocation4] sm:$0xf0] %vm473, %v471
        %v475 = vmul.f32 %v466, 0.9
        %v476 = vadd.f32 %v475, %v445
        %vm477 = vcmp.gt.f32.partialorder %v476, 1.0
        %v478 = vsub.f32 %v476, 1.0
        %v479 = vsel %vm477, %v478, %v476
        %v480 = vsel %vm477, 1, 0
        %v481 = vcvt.s32.f32 %v480
        %v482 = vpack.c.bf16 %v481, %v481
        %483 = vst.msk [vmem:[#allocation4 + $0x8] sm:$0xf] %vm460, %v482
        %v484 = vmul.f32 %v479, 0.9
        %v485 = vadd.f32 %v484, %v448
        %vm486 = vcmp.gt.f32.partialorder %v485, 1.0
        %v487 = vsub.f32 %v485, 1.0
        %v488 = vsel %vm486, %v487, %v485
        %v489 = vsel %vm486, 1, 0
        %v490 = vcvt.s32.f32 %v489
        %v491 = vpack.c.bf16 %v490, %v490
        %v493 = vrot.slane %v491, 4
        %495 = vst.msk [vmem:[#allocation4 + $0x8] sm:$0xf0] %vm473, %v493
        %vm496 = vcmask 261120
        %497 = vst.msk [vmem:[#allocation2] sm:$0xff] %vm496, %v488
        %v498 = vld [vmem:[#allocation4] sm:$0xff]
        %v499 = vld [vmem:[#allocation4 + $0x8] sm:$0xff]
        %v500 = vld [vmem:[#allocation11] sm:$0xf]
        %v501 = vld [vmem:[#allocation11 + $0x4] sm:$0xf]
        %v502 = vld [vmem:[#allocation11 + $0x8] sm:$0xf]
        %v503 = vld [vmem:[#allocation11 + $0xc] sm:$0xf]
        %v504 = vld [vmem:[#allocation13] sm:$0x1]
        %v506 = vlaneseq
        %v507 = vshrl.u32 %v506, 7
        %v508 = vsub.s32 0, %v507
        %v509 = vrot.slane %v504, %v508
        %v515 = vunpack.c.l.b16 %v500
        %v516 = vunpack.c.l.b16 %v501
        %v517 = vunpack.c.l.b16 %v502
        %v518 = vunpack.c.l.b16 %v503
        %v519 = vpack.c.b16 %v516, %v515
        %v520 = vpack.c.b16 %v518, %v517
        %v524 = vsel %vm496, %v498, 0
        %v527 = vsel %vm496, %v499, 0
        %529 = vmatprep.subr.bf16.mxu0 0
        %530 = vmatpush1.bf16.msra.mxu0 %v519
        %531 = vmatprep.subr.bf16.mxu0 0
        %532 = vmatpush1.bf16.msra.mxu0 %v520
        %533 = vmatprep.subr.bf16.mxu0 0
        %534 = vmatpush1.bf16.msra.mxu0 0
        %535 = vmatprep.subr.bf16.mxu0 0
        %536 = vmatpush1.bf16.msra.mxu0 0
        %537 = vmatprep.subr.bf16.mxu0 0
        %538 = vmatpush1.bf16.msra.mxu0 0
        %539 = vmatprep.subr.bf16.mxu0 0
        %540 = vmatpush1.bf16.msra.mxu0 0
        %541 = vmatprep.subr.bf16.mxu0 0
        %542 = vmatpush1.bf16.msra.mxu0 0
        %543 = vmatprep.subr.bf16.mxu0 0
        %544 = vmatpush1.bf16.msra.mxu0 0
        %545 = vmatprep.subr.bf16.mxu0 0
        %546 = vmatpush1.bf16.msra.mxu0 0
        %547 = vmatprep.subr.bf16.mxu0 0
        %548 = vmatpush1.bf16.msra.mxu0 0
        %549 = vmatprep.subr.bf16.mxu0 0
        %550 = vmatpush1.bf16.msra.mxu0 0
        %551 = vmatprep.subr.bf16.mxu0 0
        %552 = vmatpush1.bf16.msra.mxu0 0
        %553 = vmatprep.subr.bf16.mxu0 0
        %554 = vmatpush1.bf16.msra.mxu0 0
        %555 = vmatprep.subr.bf16.mxu0 0
        %556 = vmatpush1.bf16.msra.mxu0 0
        %557 = vmatprep.subr.bf16.mxu0 0
        %558 = vmatpush1.bf16.msra.mxu0 0
        %559 = vmatprep.subr.bf16.mxu0 0
        %560 = vmatpush1.bf16.msra.mxu0 0
        %561 = vmatprep.mubr.bf16.mxu0 0
        %562 = vmatmul.mubr.bf16.gmra.mrb[0].mxu0 %v524
        %v563 = vpop.f32.mrb[0].mxu0
        %v564 = vadd.f32 %v509, %v563
        %v565 = vpop.f32.mrb[0].mxu0
        %v566 = vpop.f32.mrb[0].mxu0
        %v567 = vadd.f32 %v509, %v566
        %v568 = vpop.f32.mrb[0].mxu0
        %569 = vmatprep.mubr.bf16.mxu0 0
        %570 = vmatmul.mubr.bf16.gmra.mrb[0].mxu0 %v527
        %v571 = vpop.f32.mrb[0].mxu0
        %v572 = vadd.f32 %v509, %v571
        %v573 = vpop.f32.mrb[0].mxu0
        %v574 = vpop.f32.mrb[0].mxu0
        %v575 = vadd.f32 %v509, %v574
        %v576 = vpop.f32.mrb[0].mxu0
        %577 = vdwg.mxu0
        %v578 = vld [vmem:[#allocation3] sm:$0xff]
        %v579 = vmul.f32 %v578, 0.9
        %v580 = vadd.f32 %v579, %v564
        %vm581 = vcmp.gt.f32.partialorder %v580, 1.0
        %v582 = vsub.f32 %v580, 1.0
        %v583 = vsel %vm581, %v582, %v580
        %v584 = vsel %vm581, 1, 0
        %v585 = vcvt.s32.f32 %v584
        %v586 = vpack.c.bf16 %v585, %v585
        %587 = vst [vmem:[%s347] sm:$0xf] %v586
        %588 = vst [vmem:[%s354] sm:$0xff] %v583
        %v589 = vmul.f32 %v583, 0.9
        %v590 = vadd.f32 %v589, %v567
        %vm591 = vcmp.gt.f32.partialorder %v590, 1.0
        %v592 = vsub.f32 %v590, 1.0
        %v593 = vsel %vm591, %v592, %v590
        %v594 = vsel %vm591, 1, 0
        %v595 = vcvt.s32.f32 %v594
        %v596 = vpack.c.bf16 %v595, %v595
        %s597 = scalar_lea.vmem %s347, 4 [#allocation14]
        %598 = vst [vmem:[%s597] sm:$0xf] %v596
        %s599 = scalar_lea.vmem %s354, 8 [#allocation15]
        %600 = vst [vmem:[%s599] sm:$0xff] %v593
        %v601 = vmul.f32 %v593, 0.9
        %v602 = vadd.f32 %v601, %v572
        %vm603 = vcmp.gt.f32.partialorder %v602, 1.0
        %v604 = vsub.f32 %v602, 1.0
        %v605 = vsel %vm603, %v604, %v602
        %v606 = vsel %vm603, 1, 0
        %v607 = vcvt.s32.f32 %v606
        %v608 = vpack.c.bf16 %v607, %v607
        %s609 = scalar_lea.vmem %s347, 8 [#allocation14]
        %610 = vst [vmem:[%s609] sm:$0xf] %v608
        %s611 = scalar_lea.vmem %s354, 16 [#allocation15]
        %612 = vst [vmem:[%s611] sm:$0xff] %v605
        %v613 = vmul.f32 %v605, 0.9
        %v614 = vadd.f32 %v613, %v575
        %vm615 = vcmp.gt.f32.partialorder %v614, 1.0
        %v616 = vsub.f32 %v614, 1.0
        %v617 = vsel %vm615, %v616, %v614
        %v618 = vsel %vm615, 1, 0
        %v619 = vcvt.s32.f32 %v618
        %v620 = vpack.c.bf16 %v619, %v619
        %s621 = scalar_lea.vmem %s347, 12 [#allocation14]
        %622 = vst [vmem:[%s621] sm:$0xf] %v620
        %s623 = scalar_lea.vmem %s354, 24 [#allocation15]
        %624 = vst [vmem:[%s623] sm:$0xff] %v617
        %625 = vst [vmem:[#allocation3] sm:$0xff] %v617
        %s626 = sand.u32 %s163, 1
        %s627 = scalar_lea.sflag [#allocation7], %s626
        %s628 = sand.u32 %s163, 1
        %s629 = smul.addr %s628, 16
        %s630 = scalar_lea.vmem [#allocation14], %s629
        %s631 = sand.u32 %s191, 1
        %s632 = scalar_lea.sflag [#allocation16], %s631
        %s633 = sand.u32 %s191, 1
        %s634 = smul.addr %s633, 32
        %s635 = scalar_lea.vmem [#allocation15], %s634
        // Predicated region
        $region65: #{tpu_custom_call.1} parent=39 // pred_check
          %p636 = pneg %p173
        $region66: #{tpu_custom_call.1} parent=39 // pred_check_branch
          %638 = sbr.rel (%p636) target = $region68
        $region67: #{tpu_custom_call.1} parent=39 // pred_region
          %s639 = smul.u32 4, %s34
          %s641 = ssub.s32 256, 256
          %642 = vsyncadd %s627, %s641
          %s643 = smul.addr %s639, 2
          %s644 = sadd.s32 %s33, %s643
          %s645 = smul.addr %s644, 64
          %s646 = scalar_lea.hbm %s5, %s645
          %s647 = sshll.u32 %s630, 4
          %s648 = int_to_ptr.vmem [resolvable:$true] %s647
          %653 = dma.vmem_to_hbm [thread:$0]  %s648, 256, %s646, %s627, 64, 128, 4
        $region68: #{tpu_custom_call.1} parent=39 // pred_fallthru
          _
        // Predicated region
        $region69: #{tpu_custom_call.1} parent=39 // pred_check
          %p654 = pneg %p201
        $region70: #{tpu_custom_call.1} parent=39 // pred_check_branch
          %656 = sbr.rel (%p654) target = $region72
        $region71: #{tpu_custom_call.1} parent=39 // pred_region
          %s657 = smul.u32 4, %s34
          %s659 = ssub.s32 512, 512
          %660 = vsyncadd %s632, %s659
          %s661 = smul.addr %s657, 2
          %s662 = sadd.s32 %s33, %s661
          %s663 = smul.addr %s662, 128
          %s664 = scalar_lea.hbm %s6, %s663
          %s665 = sshll.u32 %s635, 4
          %s666 = int_to_ptr.vmem [resolvable:$true] %s665
          %671 = dma.vmem_to_hbm [thread:$0]  %s666, 512, %s664, %s632, 128, 256, 8
        $region72: #{tpu_custom_call.1} parent=39 // pred_fallthru
          _
      $region40: #{tpu_custom_call.1} parent=5 // pred_fallthru
        _
      %p672 = scmp.le.s32.totalorder 2, %s24
      // Predicated region
      $region73: #{tpu_custom_call.1} parent=5 // pred_check
        %p673 = pneg %p672
      $region74: #{tpu_custom_call.1} parent=5 // pred_check_branch
        %675 = sbr.rel (%p673) target = $region76
      $region75: #{tpu_custom_call.1} parent=5 // pred_region
        %s676 = ssub.s32 %s24, 2
        // Predicated region
        $region77: #{tpu_custom_call.1} parent=75 // pred_check
          %p677 = pneg %p179
        $region78: #{tpu_custom_call.1} parent=75 // pred_check_branch
          %679 = sbr.rel (%p677) target = $region80
        $region79: #{tpu_custom_call.1} parent=75 // pred_region
          %s680 = sand.u32 %s164, 1
          %s681 = scalar_lea.sflag [#allocation7], %s680
          %s682 = sand.u32 %s164, 1
          %s683 = smul.addr %s682, 16
          %s684 = scalar_lea.vmem [#allocation14], %s683
          %685 = dma.done %s681, 256
        $region80: #{tpu_custom_call.1} parent=75 // pred_fallthru
          _
        // Predicated region
        $region81: #{tpu_custom_call.1} parent=75 // pred_check
          %p686 = pneg %p207
        $region82: #{tpu_custom_call.1} parent=75 // pred_check_branch
          %688 = sbr.rel (%p686) target = $region84
        $region83: #{tpu_custom_call.1} parent=75 // pred_region
          %s689 = sand.u32 %s192, 1
          %s690 = scalar_lea.sflag [#allocation16], %s689
          %s691 = sand.u32 %s192, 1
          %s692 = smul.addr %s691, 32
          %s693 = scalar_lea.vmem [#allocation15], %s692
          %694 = dma.done %s690, 512
        $region84: #{tpu_custom_call.1} parent=75 // pred_fallthru
          _
      $region76: #{tpu_custom_call.1} parent=5 // pred_fallthru
        _
    $region6: #{tpu_custom_call.1} parent=1 // loop_footer
      %s28 = sadd.s32 1, %s24
    $region7: #{tpu_custom_call.1} parent=1 // loop_footer_branch
      %23 = sbr.rel target = $region3
    $region8: #{tpu_custom_call.1} parent=1 // loop_exit
      _
    %695 = vsyncpa [#allocation6], 1
    %s696 = scalar_lea.sflag [#allocation6], 1
    %697 = vsyncpa %s696, 1
    %698 = vsyncpa [#allocation9], 1
    %699 = vsyncpa [#allocation12], 1
    %700 = vsyncpa [#allocation7], 1
    %s701 = scalar_lea.sflag [#allocation7], 1
    %702 = vsyncpa %s701, 1
    %703 = vsyncpa [#allocation16], 1
    %s704 = scalar_lea.sflag [#allocation16], 1
    %705 = vsyncpa %s704, 1

</llo_original>
